<compile_context>
chip_gen: v5e
topology: v5e:2x2
jax: 0.10.0
libtpu: 0.0.40
codegen_flags: <defaults>
</compile_context>

<pallas_src>
import functools

import jax
import jax.numpy as jnp
from jax.experimental import pallas as pl
from jax.experimental.pallas import tpu as pltpu


# ---------------------------------------------------------------------------
# Pallas kernel: elementwise lambd(x) + eps on one lane-dense VMEM tile.
# ---------------------------------------------------------------------------
def _lambda_kernel(x_ref, o_ref, *, lambd_name: str, eps: float):
    # Always compute in f32: keeps eps=1e-4 meaningful for bf16 I/O and is
    # nowhere near the bottleneck (kernel is HBM-bound).
    x = x_ref[...].astype(jnp.float32)

    if lambd_name == "softplus":
        # numerically stable softplus: max(x,0) + log1p(exp(-|x|))
        y = jnp.maximum(x, 0.0) + jnp.log1p(jnp.exp(-jnp.abs(x)))
    elif lambd_name == "exp":
        y = jnp.exp(x)
    elif lambd_name == "identity":
        y = x
    else:
        raise ValueError(f"unsupported lambd: {lambd_name}")
    # TODO(synk): `lambd` in PyTorch is an arbitrary Python callable; only the
    # elementwise lambdas used in the TEAM model are reproduced here.

    o_ref[...] = (y + jnp.float32(eps)).astype(o_ref.dtype)


def _lambda_jnp(x, lambd_name: str, eps: float):
    """Plain-jnp path (small tensors) -- XLA fuses this into the producer."""
    x32 = x.astype(jnp.float32)
    if lambd_name == "softplus":
        y = jnp.maximum(x32, 0.0) + jnp.log1p(jnp.exp(-jnp.abs(x32)))
    elif lambd_name == "exp":
        y = jnp.exp(x32)
    elif lambd_name == "identity":
        y = x32
    else:
        raise ValueError(f"unsupported lambd: {lambd_name}")
    return (y + jnp.float32(eps)).astype(x.dtype)


# ---------------------------------------------------------------------------
# Wrapper (the "LambdaLayer" forward pass)
# ---------------------------------------------------------------------------
def lambda_layer(x, lambd_name: str = "softplus", eps: float = 1e-4,
                 *, min_pallas_elems: int = 256 * 1024):
    """Pallas equivalent of LambdaLayer(lambd, eps).forward(x)."""
    n = x.size
    if n == 0:
        return x

    # ---- small-tensor bypass: let XLA fuse it ------------------------------
    if n < min_pallas_elems:
        return _lambda_jnp(x, lambd_name, eps)

    orig_shape = x.shape
    itemsize = jnp.dtype(x.dtype).itemsize
    sub = 8 * max(1, 4 // itemsize)          # sublane rows: 8 f32, 16 bf16

    # ---- lane-dense 2D layout: prefer a cols that divides n (no padding) ---
    cols = 128
    for c in (1024, 512, 256, 128):
        if n % c == 0:
            cols = c
            break
    rows = pl.cdiv(n, cols)
    rows_padded = ((rows + sub - 1) // sub) * sub   # pad only to sublane rows
    n_padded = rows_padded * cols
    padded = (n_padded != n)

    xf = x.reshape(-1)
    if padded:
        xf = jnp.pad(xf, (0, n_padded - n))
    x2 = xf.reshape(rows_padded, cols)

    # ---- block size: ~4 MiB of input per block, >=2 grid steps when possible
    target_rows = max(sub, (4 * 1024 * 1024) // (cols * itemsize))
    half_rows = ((pl.cdiv(rows_padded, 2) + sub - 1) // sub) * sub
    block_rows = min(target_rows, half_rows, rows_padded)
    block_rows = max(sub, (block_rows // sub) * sub)

    grid = (pl.cdiv(rows_padded, block_rows),)      # ragged last block is OK

    n_trans = {"softplus": 2, "exp": 1, "identity": 0}[lambd_name]
    cost = pl.CostEstimate(
        flops=3 * n_padded,
        transcendentals=n_trans * n_padded,
        bytes_accessed=2 * n_padded * itemsize,
    )

    kernel = functools.partial(_lambda_kernel, lambd_name=lambd_name, eps=eps)

    out2 = pl.pallas_call(
        kernel,
        out_shape=jax.ShapeDtypeStruct((rows_padded, cols), x.dtype),
        grid=grid,
        in_specs=[pl.BlockSpec((block_rows, cols), lambda i: (i, 0))],
        out_specs=pl.BlockSpec((block_rows, cols), lambda i: (i, 0)),
        compiler_params=pltpu.CompilerParams(
            dimension_semantics=("parallel",),
            vmem_limit_bytes=32 * 1024 * 1024,
        ),
        cost_estimate=cost,
        # Only alias when x2 is a throwaway padded temp (never the user's x).
        input_output_aliases=({0: 0} if padded else {}),
    )(x2)

    if padded:
        return out2.reshape(-1)[:n].reshape(orig_shape)
    return out2.reshape(orig_shape)


# Pure-JAX reference for correctness checking.
def lambda_layer_ref(x, lambd_name: str = "softplus", eps: float = 1e-4):
    x32 = x.astype(jnp.float32)
    if lambd_name == "softplus":
        y = jax.nn.softplus(x32)
    elif lambd_name == "exp":
        y = jnp.exp(x32)
    else:
        y = x32
    return (y + eps).astype(x.dtype)


if __name__ == "__main__":
    key = jax.random.PRNGKey(0)
    k1, k2, k3, k4 = jax.random.split(key, 4)

    # 1) Small NCHW activation (the shape this layer sees in the TEAM model):
    #    hits the small-tensor bypass (fused XLA elementwise path).
    x_small = jax.random.normal(k1, (2, 4, 16, 16), dtype=jnp.float32)
    out_small = jax.block_until_ready(lambda_layer(x_small, "softplus", 1e-4))
    ref_small = lambda_layer_ref(x_small, "softplus", 1e-4)
    assert out_small.shape == x_small.shape and out_small.dtype == x_small.dtype
    assert jnp.allclose(out_small, ref_small, atol=1e-5, rtol=1e-5), "bypass softplus mismatch"

    # 2) Force the Pallas path: n % 1024 == 0 -> no pad, no slice-back, grid of 2.
    x_med = jax.random.normal(k2, (2, 4, 64, 128), dtype=jnp.float32)
    out_med = jax.block_until_ready(
        lambda_layer(x_med, "softplus", 1e-4, min_pallas_elems=0))
    ref_med = lambda_layer_ref(x_med, "softplus", 1e-4)
    assert out_med.shape == x_med.shape and out_med.dtype == x_med.dtype
    assert jnp.allclose(out_med, ref_med, atol=1e-5, rtol=1e-5), "pallas softplus mismatch"

    # 3) Odd shape forced through Pallas: exercises sublane pad + ragged last block.
    x_odd = jax.random.normal(k3, (3, 5, 17, 19), dtype=jnp.float32)
    out_odd = jax.block_until_ready(
        lambda_layer(x_odd, "exp", 1e-4, min_pallas_elems=0))
    ref_odd = lambda_layer_ref(x_odd, "exp", 1e-4)
    assert out_odd.shape == x_odd.shape
    assert jnp.allclose(out_odd, ref_odd, atol=1e-5, rtol=1e-5), "pallas exp mismatch"

    # 4) bf16 I/O forced through Pallas; compute is f32 so eps=1e-4 survives.
    x_bf = jax.random.normal(k4, (2, 4, 16, 16), dtype=jnp.bfloat16)
    out_bf = jax.block_until_ready(
        lambda_layer(x_bf, "softplus", 1e-4, min_pallas_elems=0))
    ref_bf = lambda_layer_ref(x_bf, "softplus", 1e-4)
    assert out_bf.shape == x_bf.shape and out_bf.dtype == jnp.bfloat16
    assert jnp.allclose(out_bf.astype(jnp.float32), ref_bf.astype(jnp.float32),
                        atol=1e-2, rtol=1e-2), "bf16 softplus mismatch"

    print("KERNEL_OK")
</pallas_src>

<mosaic_0001>
module attributes {stable_mosaic.version = 11 : i64} {
  func.func @_lambda_kernel(%arg0: i32, %arg1: memref<32x1024xf32, #tpu.memory_space<vmem>>, %arg2: memref<32x1024xf32, #tpu.memory_space<vmem>>) attributes {dimension_semantics = [#tpu.dimension_semantics<parallel>], iteration_bounds = array<i64: 2>, scalar_prefetch = 0 : i64, scratch_operands = 0 : i64, tpu.core_type = #tpu.core_type<tc>, window_params = [{transform_indices = @transform_0, window_bounds = array<i64: 32, 1024>}, {transform_indices = @transform_1, window_bounds = array<i64: 32, 1024>}]} {
    %c0 = arith.constant 0 : index
    %c0_0 = arith.constant 0 : index
    %0 = vector.load %arg1[%c0, %c0_0] : memref<32x1024xf32, #tpu.memory_space<vmem>>, vector<32x1024xf32>
    %cst = arith.constant 0.000000e+00 : f32
    %1 = vector.broadcast %cst : f32 to vector<32x1024xf32>
    %2 = arith.maximumf %0, %1 : vector<32x1024xf32>
    %3 = math.absf %0 : vector<32x1024xf32>
    %cst_1 = arith.constant 0.000000e+00 : f32
    %4 = vector.broadcast %cst_1 : f32 to vector<32x1024xf32>
    %5 = arith.subf %4, %3 : vector<32x1024xf32>
    %6 = math.exp %5 : vector<32x1024xf32>
    %7 = math.log1p %6 : vector<32x1024xf32>
    %8 = arith.addf %2, %7 : vector<32x1024xf32>
    %cst_2 = arith.constant 9.99999974E-5 : f32
    %9 = vector.broadcast %cst_2 : f32 to vector<32x1024xf32>
    %10 = arith.addf %8, %9 : vector<32x1024xf32>
    %c0_3 = arith.constant 0 : index
    %c0_4 = arith.constant 0 : index
    %11 = vector.load %arg2[%c0_3, %c0_4] : memref<32x1024xf32, #tpu.memory_space<vmem>>, vector<32x1024xf32>
    tpu.vector_store %arg2[%c0_3, %c0_4], %10 {strides = array<i32>} : memref<32x1024xf32, #tpu.memory_space<vmem>>, vector<32x1024xf32>,
    return
  }
  func.func @transform_0(%arg0: i32) -> (i32, i32) {
    %c0_i32 = arith.constant 0 : i32
    %c0_i32_0 = arith.constant 0 : i32
    return %arg0, %c0_i32 : i32, i32
  }
  func.func @transform_1(%arg0: i32) -> (i32, i32) {
    %c0_i32 = arith.constant 0 : i32
    %c0_i32_0 = arith.constant 0 : i32
    return %arg0, %c0_i32 : i32, i32
  }
}

</mosaic_0001>

<llo_original>
// kernel: tpu_custom_call.1
$region0: #{tpu_custom_call.1}
  #allocation0 [shape = 'u32[]', space=smem, size = 0x4, offset = 0x4, fixed_abs, tag = 'smem constant byte address 0x4 - core index']
  #allocation1 [shape = 'u32[72,128]{1,0:T(1,128)}', space=vmem, size = 0x9000, scoped, tag = 'internal scratch']
  %s0 = inlined_call_operand.hbm [shape: f32[64,1024], index: 0, kind: input, shape index: {}]
  %s1 = inlined_call_operand.hbm [shape: f32[64,1024], index: 1, kind: output, shape index: {}]
  %s2 = sld [smem:[#allocation0]]
  $region41: #{tpu_custom_call.1} parent=0
    _
  %s4 = ssub.s32 1, %s2
  %s5 = scalar_select 0, %s4, %s2
  $region1: #{tpu_custom_call.1} parent=0
    #allocation2 [shape = 'u8[262144]{0}', space=vmem, size = 0x40000, scoped, tag = 'input window, operand 0']
    #allocation3 [shape = 's32[2]{0}', space=sflag, size = 0x8, scoped, tag = 'scoped memory for tpu_custom_call.1']
    #allocation4 [shape = 's32[2]{0}', space=sflag, size = 0x8, scoped, tag = 'scoped memory for tpu_custom_call.1']
    #allocation5 [shape = 'u8[262144]{0}', space=vmem, size = 0x40000, scoped, tag = 'output window, operand 0']
    %6 = vsyncpa [#allocation3], 0
    %s7 = scalar_lea.sflag [#allocation3], 1
    %8 = vsyncpa %s7, 0
    %9 = vsyncpa [#allocation4], 0
    %s10 = scalar_lea.sflag [#allocation4], 1
    %11 = vsyncpa %s10, 0
    loop: start=0, step=1, limit=4
    $region2: #{tpu_custom_call.1} parent=1 // loop_pre_header
      _
    $region3: #{tpu_custom_call.1} parent=1 // loop_header
      %s13 = sphi 0, %s17
      %p14 = scmp.ge.s32.totalorder %s13, 4
      %s23 = sphi 0, %s25
      %s26 = sphi 0, %s23
      %s27 = sphi 0, %s26
      %s43 = sphi 0, %s27
      %s49 = sphi 0, %s51
      %s52 = sphi 0, %s49
      %s53 = sphi 0, %s52
      %s69 = sphi 0, %s53
    $region4: #{tpu_custom_call.1} parent=1 // loop_header_branch
      %16 = sbr.rel (%p14) target = $region8
    $region5: #{tpu_custom_call.1} parent=1 // loop_body
      %s18 = ssub.s32 %s13, 1
      %s19 = ssub.s32 %s13, 2
      %s20 = sadd.s32 %s13, 1
      %s21 = ssub.s32 %s13, %s20
      %p22 = scmp.eq.s32.totalorder %s21, 0
      %s24 = sadd.s32 %s23, 1
      %s25 = scalar_select %p22, %s23, %s24
      %p28 = pneg %p22
      %p29 = scmp.eq.s32.totalorder %s13, 1
      %p30 = por %p28, %p29
      %p31 = scmp.ne.s32.totalorder %s23, %s26
      %p32 = scmp.eq.s32.totalorder %s13, 0
      %p33 = por %p31, %p32
      %p34 = scmp.ne.s32.totalorder %s23, %s26
      %p35 = scmp.eq.s32.totalorder %s18, 1
      %p36 = por %p34, %p35
      %p37 = scmp.ne.s32.totalorder %s26, %s27
      %p38 = scmp.eq.s32.totalorder %s18, 0
      %p39 = por %p37, %p38
      %p40 = scmp.ne.s32.totalorder %s26, %s27
      %p41 = scmp.eq.s32.totalorder %s19, 1
      %p42 = por %p40, %p41
      %p44 = scmp.ne.s32.totalorder %s27, %s43
      %p45 = scmp.eq.s32.totalorder %s19, 0
      %p46 = por %p44, %p45
      %s47 = ssub.s32 %s13, %s20
      %p48 = scmp.eq.s32.totalorder %s47, 0
      %s50 = sadd.s32 %s49, 1
      %s51 = scalar_select %p48, %s49, %s50
      %p54 = pneg %p48
      %p55 = scmp.eq.s32.totalorder %s13, 1
      %p56 = por %p54, %p55
      %p57 = scmp.ne.s32.totalorder %s49, %s52
      %p58 = scmp.eq.s32.totalorder %s13, 0
      %p59 = por %p57, %p58
      %p60 = scmp.ne.s32.totalorder %s49, %s52
      %p61 = scmp.eq.s32.totalorder %s18, 1
      %p62 = por %p60, %p61
      %p63 = scmp.ne.s32.totalorder %s52, %s53
      %p64 = scmp.eq.s32.totalorder %s18, 0
      %p65 = por %p63, %p64
      %p66 = scmp.ne.s32.totalorder %s52, %s53
      %p67 = scmp.eq.s32.totalorder %s19, 1
      %p68 = por %p66, %p67
      %p70 = scmp.ne.s32.totalorder %s53, %s69
      %p71 = scmp.eq.s32.totalorder %s19, 0
      %p72 = por %p70, %p71
      %p73 = scmp.le.s32.totalorder 1, %s13
      %p74 = scmp.lt.s32.totalorder %s13, 3
      %p75 = pnand %p73, %p74
      %p76 = pneg %p75
      // Predicated region
      $region9: #{tpu_custom_call.1} parent=5 // pred_check
        _
      $region10: #{tpu_custom_call.1} parent=5 // pred_check_branch
        %78 = sbr.rel (%p75) target = $region12
      $region11: #{tpu_custom_call.1} parent=5 // pred_region
        %s79 = ssub.s32 %s13, 1
      $region12: #{tpu_custom_call.1} parent=5 // pred_fallthru
        _
      %p80 = scmp.lt.s32.totalorder %s13, 2
      // Predicated region
      $region13: #{tpu_custom_call.1} parent=5 // pred_check
        %p81 = pneg %p80
      $region14: #{tpu_custom_call.1} parent=5 // pred_check_branch
        %83 = sbr.rel (%p81) target = $region16
      $region15: #{tpu_custom_call.1} parent=5 // pred_region
        // Predicated region
        $region17: #{tpu_custom_call.1} parent=15 // pred_check
          %p84 = pneg %p33
        $region18: #{tpu_custom_call.1} parent=15 // pred_check_branch
          %86 = sbr.rel (%p84) target = $region20
        $region19: #{tpu_custom_call.1} parent=15 // pred_region
          %s87 = sand.u32 %s23, 1
          %s88 = scalar_lea.sflag [#allocation3], %s87
          %s89 = sand.u32 %s23, 1
          %s90 = smul.addr %s89, 256
          %s91 = scalar_lea.vmem [#allocation2], %s90
          %s92 = smul.u32 4, %s13
          %94 = vsyncadd %s88, 0
          %s95 = smul.addr %s92, 8
          %s96 = smul.addr %s95, 8
          %s97 = scalar_lea.hbm %s0, %s96
          %s98 = sshll.u32 %s97, 4
          %s99 = int_to_ptr.hbm [resolvable:$true] %s98
          %s100 = sshll.u32 %s91, 4
          %s101 = int_to_ptr.vmem [resolvable:$true] %s100
          %106 = dma.hbm_to_vmem [thread:$0]  %s99, 4096, %s101, %s88, 1024, 1024, 64
        $region20: #{tpu_custom_call.1} parent=15 // pred_fallthru
          _
      $region16: #{tpu_custom_call.1} parent=5 // pred_fallthru
        _
      %p107 = scmp.le.s32.totalorder 1, %s13
      %p108 = scmp.lt.s32.totalorder %s13, 3
      %p109 = pnand %p107, %p108
      %p110 = pneg %p109
      // Predicated region
      $region21: #{tpu_custom_call.1} parent=5 // pred_check
        _
      $region22: #{tpu_custom_call.1} parent=5 // pred_check_branch
        %112 = sbr.rel (%p109) target = $region24
      $region23: #{tpu_custom_call.1} parent=5 // pred_region
        %s113 = ssub.s32 %s13, 1
        %s114 = sand.u32 %s26, 1
        %s115 = scalar_lea.sflag [#allocation3], %s114
        %s116 = sand.u32 %s26, 1
        %s117 = smul.addr %s116, 256
        %s118 = scalar_lea.vmem [#allocation2], %s117
        // Predicated region
        $region25: #{tpu_custom_call.1} parent=23 // pred_check
          %p119 = pneg %p39
        $region26: #{tpu_custom_call.1} parent=23 // pred_check_branch
          %121 = sbr.rel (%p119) target = $region28
        $region27: #{tpu_custom_call.1} parent=23 // pred_region
          %123 = dma.done %s115, 4096
        $region28: #{tpu_custom_call.1} parent=23 // pred_fallthru
          _
        %s124 = sand.u32 %s26, 1
        %s125 = scalar_lea.sflag [#allocation3], %s124
        %s126 = sand.u32 %s26, 1
        %s127 = smul.addr %s126, 256
        %s128 = scalar_lea.vmem [#allocation2], %s127
        %p129 = pneg %p39
        %p130 = pneg %p36
        %p131 = pneg %p65
        %p132 = pneg %p62
        %s133 = sand.u32 %s52, 1
        %s134 = scalar_lea.sflag [#allocation4], %s133
        %s135 = sand.u32 %s52, 1
        %s136 = smul.addr %s135, 256
        %s137 = scalar_lea.vmem [#allocation5], %s136
        %s138 = smul.u32 4, %s18
        %s139 = smul.u32 4, %s18
        %v140 = vld [vmem:[%s118] sm:$0xff]
        %v141 = vld [vmem:[%s118 + $0x8] sm:$0xff]
        %v142 = vld [vmem:[%s118 + $0x10] sm:$0xff]
        %v143 = vld [vmem:[%s118 + $0x18] sm:$0xff]
        %v144 = vld [vmem:[%s118 + $0x20] sm:$0xff]
        %v145 = vld [vmem:[%s118 + $0x28] sm:$0xff]
        %v146 = vld [vmem:[%s118 + $0x30] sm:$0xff]
        %v147 = vld [vmem:[%s118 + $0x38] sm:$0xff]
        %v148 = vld [vmem:[%s118 + $0x40] sm:$0xff]
        %v149 = vld [vmem:[%s118 + $0x48] sm:$0xff]
        %v150 = vld [vmem:[%s118 + $0x50] sm:$0xff]
        %v151 = vld [vmem:[%s118 + $0x58] sm:$0xff]
        %v152 = vld [vmem:[%s118 + $0x60] sm:$0xff]
        %v153 = vld [vmem:[%s118 + $0x68] sm:$0xff]
        %v154 = vld [vmem:[%s118 + $0x70] sm:$0xff]
        %v155 = vld [vmem:[%s118 + $0x78] sm:$0xff]
        %v156 = vld [vmem:[%s118 + $0x80] sm:$0xff]
        %v157 = vld [vmem:[%s118 + $0x88] sm:$0xff]
        %v158 = vld [vmem:[%s118 + $0x90] sm:$0xff]
        %v159 = vld [vmem:[%s118 + $0x98] sm:$0xff]
        %v160 = vld [vmem:[%s118 + $0xa0] sm:$0xff]
        %v161 = vld [vmem:[%s118 + $0xa8] sm:$0xff]
        %v162 = vld [vmem:[%s118 + $0xb0] sm:$0xff]
        %v163 = vld [vmem:[%s118 + $0xb8] sm:$0xff]
        %v164 = vld [vmem:[%s118 + $0xc0] sm:$0xff]
        %v165 = vld [vmem:[%s118 + $0xc8] sm:$0xff]
        %v166 = vld [vmem:[%s118 + $0xd0] sm:$0xff]
        %v167 = vld [vmem:[%s118 + $0xd8] sm:$0xff]
        %v168 = vld [vmem:[%s118 + $0xe0] sm:$0xff]
        %v169 = vld [vmem:[%s118 + $0xe8] sm:$0xff]
        %v170 = vld [vmem:[%s118 + $0xf0] sm:$0xff]
        %v171 = vld [vmem:[%s118 + $0xf8] sm:$0xff]
        %v172 = vmax.f32 %v140, 0.0
        %v173 = vmax.f32 %v141, 0.0
        %v174 = vmax.f32 %v142, 0.0
        %v175 = vmax.f32 %v143, 0.0
        %v176 = vmax.f32 %v144, 0.0
        %v177 = vmax.f32 %v145, 0.0
        %v178 = vmax.f32 %v146, 0.0
        %v179 = vmax.f32 %v147, 0.0
        %v180 = vmax.f32 %v148, 0.0
        %v181 = vmax.f32 %v149, 0.0
        %v182 = vmax.f32 %v150, 0.0
        %v183 = vmax.f32 %v151, 0.0
        %v184 = vmax.f32 %v152, 0.0
        %v185 = vmax.f32 %v153, 0.0
        %v186 = vmax.f32 %v154, 0.0
        %v187 = vmax.f32 %v155, 0.0
        %v188 = vmax.f32 %v156, 0.0
        %v189 = vmax.f32 %v157, 0.0
        %v190 = vmax.f32 %v158, 0.0
        %v191 = vmax.f32 %v159, 0.0
        %v192 = vmax.f32 %v160, 0.0
        %v193 = vmax.f32 %v161, 0.0
        %v194 = vmax.f32 %v162, 0.0
        %v195 = vmax.f32 %v163, 0.0
        %v196 = vmax.f32 %v164, 0.0
        %v197 = vmax.f32 %v165, 0.0
        %v198 = vmax.f32 %v166, 0.0
        %v199 = vmax.f32 %v167, 0.0
        %v200 = vmax.f32 %v168, 0.0
        %v201 = vmax.f32 %v169, 0.0
        %v202 = vmax.f32 %v170, 0.0
        %v203 = vmax.f32 %v171, 0.0
        %v204 = vand.u32 2147483647, %v140
        %v205 = vand.u32 2147483647, %v141
        %v206 = vand.u32 2147483647, %v142
        %v207 = vand.u32 2147483647, %v143
        %v208 = vand.u32 2147483647, %v144
        %v209 = vand.u32 2147483647, %v145
        %v210 = vand.u32 2147483647, %v146
        %v211 = vand.u32 2147483647, %v147
        %v212 = vand.u32 2147483647, %v148
        %v213 = vand.u32 2147483647, %v149
        %v214 = vand.u32 2147483647, %v150
        %v215 = vand.u32 2147483647, %v151
        %v216 = vand.u32 2147483647, %v152
        %v217 = vand.u32 2147483647, %v153
        %v218 = vand.u32 2147483647, %v154
        %v219 = vand.u32 2147483647, %v155
        %v220 = vand.u32 2147483647, %v156
        %v221 = vand.u32 2147483647, %v157
        %v222 = vand.u32 2147483647, %v158
        %v223 = vand.u32 2147483647, %v159
        %v224 = vand.u32 2147483647, %v160
        %v225 = vand.u32 2147483647, %v161
        %v226 = vand.u32 2147483647, %v162
        %v227 = vand.u32 2147483647, %v163
        %v228 = vand.u32 2147483647, %v164
        %v229 = vand.u32 2147483647, %v165
        %v230 = vand.u32 2147483647, %v166
        %v231 = vand.u32 2147483647, %v167
        %v232 = vand.u32 2147483647, %v168
        %v233 = vand.u32 2147483647, %v169
        %v234 = vand.u32 2147483647, %v170
        %v235 = vand.u32 2147483647, %v171
        %v236 = vsub.f32 0.0, %v204
        %v237 = vsub.f32 0.0, %v205
        %v238 = vsub.f32 0.0, %v206
        %v239 = vsub.f32 0.0, %v207
        %v240 = vsub.f32 0.0, %v208
        %v241 = vsub.f32 0.0, %v209
        %v242 = vsub.f32 0.0, %v210
        %v243 = vsub.f32 0.0, %v211
        %v244 = vsub.f32 0.0, %v212
        %v245 = vsub.f32 0.0, %v213
        %v246 = vsub.f32 0.0, %v214
        %v247 = vsub.f32 0.0, %v215
        %v248 = vsub.f32 0.0, %v216
        %v249 = vsub.f32 0.0, %v217
        %v250 = vsub.f32 0.0, %v218
        %v251 = vsub.f32 0.0, %v219
        %v252 = vsub.f32 0.0, %v220
        %v253 = vsub.f32 0.0, %v221
        %v254 = vsub.f32 0.0, %v222
        %v255 = vsub.f32 0.0, %v223
        %v256 = vsub.f32 0.0, %v224
        %v257 = vsub.f32 0.0, %v225
        %v258 = vsub.f32 0.0, %v226
        %v259 = vsub.f32 0.0, %v227
        %v260 = vsub.f32 0.0, %v228
        %v261 = vsub.f32 0.0, %v229
        %v262 = vsub.f32 0.0, %v230
        %v263 = vsub.f32 0.0, %v231
        %v264 = vsub.f32 0.0, %v232
        %v265 = vsub.f32 0.0, %v233
        %v266 = vsub.f32 0.0, %v234
        %v267 = vsub.f32 0.0, %v235
        %v268 = vmul.f32 %v236, 1.442695
        %v269 = vpow.pop %v268
        %v270 = vmul.f32 %v237, 1.442695
        %v271 = vpow.pop %v270
        %v272 = vmul.f32 %v238, 1.442695
        %v273 = vpow.pop %v272
        %v274 = vmul.f32 %v239, 1.442695
        %v275 = vpow.pop %v274
        %v276 = vmul.f32 %v240, 1.442695
        %v277 = vpow.pop %v276
        %v278 = vmul.f32 %v241, 1.442695
        %v279 = vpow.pop %v278
        %v280 = vmul.f32 %v242, 1.442695
        %v281 = vpow.pop %v280
        %v282 = vmul.f32 %v243, 1.442695
        %v283 = vpow.pop %v282
        %v284 = vmul.f32 %v244, 1.442695
        %v285 = vpow.pop %v284
        %v286 = vmul.f32 %v245, 1.442695
        %v287 = vpow.pop %v286
        %v288 = vmul.f32 %v246, 1.442695
        %v289 = vpow.pop %v288
        %v290 = vmul.f32 %v247, 1.442695
        %v291 = vpow.pop %v290
        %v292 = vmul.f32 %v248, 1.442695
        %v293 = vpow.pop %v292
        %v294 = vmul.f32 %v249, 1.442695
        %v295 = vpow.pop %v294
        %v296 = vmul.f32 %v250, 1.442695
        %v297 = vpow.pop %v296
        %v298 = vmul.f32 %v251, 1.442695
        %v299 = vpow.pop %v298
        %v300 = vmul.f32 %v252, 1.442695
        %v301 = vpow.pop %v300
        %v302 = vmul.f32 %v253, 1.442695
        %v303 = vpow.pop %v302
        %v304 = vmul.f32 %v254, 1.442695
        %v305 = vpow.pop %v304
        %v306 = vmul.f32 %v255, 1.442695
        %v307 = vpow.pop %v306
        %v308 = vmul.f32 %v256, 1.442695
        %v309 = vpow.pop %v308
        %v310 = vmul.f32 %v257, 1.442695
        %v311 = vpow.pop %v310
        %v312 = vmul.f32 %v258, 1.442695
        %v313 = vpow.pop %v312
        %v314 = vmul.f32 %v259, 1.442695
        %v315 = vpow.pop %v314
        %v316 = vmul.f32 %v260, 1.442695
        %v317 = vpow.pop %v316
        %v318 = vmul.f32 %v261, 1.442695
        %v319 = vpow.pop %v318
        %v320 = vmul.f32 %v262, 1.442695
        %v321 = vpow.pop %v320
        %v322 = vmul.f32 %v263, 1.442695
        %v323 = vpow.pop %v322
        %v324 = vmul.f32 %v264, 1.442695
        %v325 = vpow.pop %v324
        %v326 = vmul.f32 %v265, 1.442695
        %v327 = vpow.pop %v326
        %v328 = vmul.f32 %v266, 1.442695
        %v329 = vpow.pop %v328
        %v330 = vmul.f32 %v267, 1.442695
        %v331 = vpow.pop %v330
        %v332 = vadd.f32 %v269, 1.0
        %v333 = vlog2.pop %v332
        %v334 = vmul.f32 %v333, 0.6931472
        %v335 = vmul.f32 -0.5, %v269
        %v336 = vadd.f32 %v335, 1.0
        %v337 = vmul.f32 %v336, %v269
        %v338 = vand.u32 2147483647, %v269
        %vm339 = vcmp.lt.f32.partialorder %v338, 0.0004427343
        %v340 = vsel %vm339, %v337, %v334
        %v341 = vadd.f32 %v271, 1.0
        %v342 = vlog2.pop %v341
        %v343 = vmul.f32 %v342, 0.6931472
        %v344 = vmul.f32 -0.5, %v271
        %v345 = vadd.f32 %v344, 1.0
        %v346 = vmul.f32 %v345, %v271
        %v347 = vand.u32 2147483647, %v271
        %vm348 = vcmp.lt.f32.partialorder %v347, 0.0004427343
        %v349 = vsel %vm348, %v346, %v343
        %v350 = vadd.f32 %v273, 1.0
        %v351 = vlog2.pop %v350
        %v352 = vmul.f32 %v351, 0.6931472
        %v353 = vmul.f32 -0.5, %v273
        %v354 = vadd.f32 %v353, 1.0
        %v355 = vmul.f32 %v354, %v273
        %v356 = vand.u32 2147483647, %v273
        %vm357 = vcmp.lt.f32.partialorder %v356, 0.0004427343
        %v358 = vsel %vm357, %v355, %v352
        %v359 = vadd.f32 %v275, 1.0
        %v360 = vlog2.pop %v359
        %v361 = vmul.f32 %v360, 0.6931472
        %v362 = vmul.f32 -0.5, %v275
        %v363 = vadd.f32 %v362, 1.0
        %v364 = vmul.f32 %v363, %v275
        %v365 = vand.u32 2147483647, %v275
        %vm366 = vcmp.lt.f32.partialorder %v365, 0.0004427343
        %v367 = vsel %vm366, %v364, %v361
        %v368 = vadd.f32 %v277, 1.0
        %v369 = vlog2.pop %v368
        %v370 = vmul.f32 %v369, 0.6931472
        %v371 = vmul.f32 -0.5, %v277
        %v372 = vadd.f32 %v371, 1.0
        %v373 = vmul.f32 %v372, %v277
        %v374 = vand.u32 2147483647, %v277
        %vm375 = vcmp.lt.f32.partialorder %v374, 0.0004427343
        %v376 = vsel %vm375, %v373, %v370
        %v377 = vadd.f32 %v279, 1.0
        %v378 = vlog2.pop %v377
        %v379 = vmul.f32 %v378, 0.6931472
        %v380 = vmul.f32 -0.5, %v279
        %v381 = vadd.f32 %v380, 1.0
        %v382 = vmul.f32 %v381, %v279
        %v383 = vand.u32 2147483647, %v279
        %vm384 = vcmp.lt.f32.partialorder %v383, 0.0004427343
        %v385 = vsel %vm384, %v382, %v379
        %v386 = vadd.f32 %v281, 1.0
        %v387 = vlog2.pop %v386
        %v388 = vmul.f32 %v387, 0.6931472
        %v389 = vmul.f32 -0.5, %v281
        %v390 = vadd.f32 %v389, 1.0
        %v391 = vmul.f32 %v390, %v281
        %v392 = vand.u32 2147483647, %v281
        %vm393 = vcmp.lt.f32.partialorder %v392, 0.0004427343
        %v394 = vsel %vm393, %v391, %v388
        %v395 = vadd.f32 %v283, 1.0
        %v396 = vlog2.pop %v395
        %v397 = vmul.f32 %v396, 0.6931472
        %v398 = vmul.f32 -0.5, %v283
        %v399 = vadd.f32 %v398, 1.0
        %v400 = vmul.f32 %v399, %v283
        %v401 = vand.u32 2147483647, %v283
        %vm402 = vcmp.lt.f32.partialorder %v401, 0.0004427343
        %v403 = vsel %vm402, %v400, %v397
        %v404 = vadd.f32 %v285, 1.0
        %v405 = vlog2.pop %v404
        %v406 = vmul.f32 %v405, 0.6931472
        %v407 = vmul.f32 -0.5, %v285
        %v408 = vadd.f32 %v407, 1.0
        %v409 = vmul.f32 %v408, %v285
        %v410 = vand.u32 2147483647, %v285
        %vm411 = vcmp.lt.f32.partialorder %v410, 0.0004427343
        %v412 = vsel %vm411, %v409, %v406
        %v413 = vadd.f32 %v287, 1.0
        %v414 = vlog2.pop %v413
        %v415 = vmul.f32 %v414, 0.6931472
        %v416 = vmul.f32 -0.5, %v287
        %v417 = vadd.f32 %v416, 1.0
        %v418 = vmul.f32 %v417, %v287
        %v419 = vand.u32 2147483647, %v287
        %vm420 = vcmp.lt.f32.partialorder %v419, 0.0004427343
        %v421 = vsel %vm420, %v418, %v415
        %v422 = vadd.f32 %v289, 1.0
        %v423 = vlog2.pop %v422
        %v424 = vmul.f32 %v423, 0.6931472
        %v425 = vmul.f32 -0.5, %v289
        %v426 = vadd.f32 %v425, 1.0
        %v427 = vmul.f32 %v426, %v289
        %v428 = vand.u32 2147483647, %v289
        %vm429 = vcmp.lt.f32.partialorder %v428, 0.0004427343
        %v430 = vsel %vm429, %v427, %v424
        %v431 = vadd.f32 %v291, 1.0
        %v432 = vlog2.pop %v431
        %v433 = vmul.f32 %v432, 0.6931472
        %v434 = vmul.f32 -0.5, %v291
        %v435 = vadd.f32 %v434, 1.0
        %v436 = vmul.f32 %v435, %v291
        %v437 = vand.u32 2147483647, %v291
        %vm438 = vcmp.lt.f32.partialorder %v437, 0.0004427343
        %v439 = vsel %vm438, %v436, %v433
        %v440 = vadd.f32 %v293, 1.0
        %v441 = vlog2.pop %v440
        %v442 = vmul.f32 %v441, 0.6931472
        %v443 = vmul.f32 -0.5, %v293
        %v444 = vadd.f32 %v443, 1.0
        %v445 = vmul.f32 %v444, %v293
        %v446 = vand.u32 2147483647, %v293
        %vm447 = vcmp.lt.f32.partialorder %v446, 0.0004427343
        %v448 = vsel %vm447, %v445, %v442
        %v449 = vadd.f32 %v295, 1.0
        %v450 = vlog2.pop %v449
        %v451 = vmul.f32 %v450, 0.6931472
        %v452 = vmul.f32 -0.5, %v295
        %v453 = vadd.f32 %v452, 1.0
        %v454 = vmul.f32 %v453, %v295
        %v455 = vand.u32 2147483647, %v295
        %vm456 = vcmp.lt.f32.partialorder %v455, 0.0004427343
        %v457 = vsel %vm456, %v454, %v451
        %v458 = vadd.f32 %v297, 1.0
        %v459 = vlog2.pop %v458
        %v460 = vmul.f32 %v459, 0.6931472
        %v461 = vmul.f32 -0.5, %v297
        %v462 = vadd.f32 %v461, 1.0
        %v463 = vmul.f32 %v462, %v297
        %v464 = vand.u32 2147483647, %v297
        %vm465 = vcmp.lt.f32.partialorder %v464, 0.0004427343
        %v466 = vsel %vm465, %v463, %v460
        %v467 = vadd.f32 %v299, 1.0
        %v468 = vlog2.pop %v467
        %v469 = vmul.f32 %v468, 0.6931472
        %v470 = vmul.f32 -0.5, %v299
        %v471 = vadd.f32 %v470, 1.0
        %v472 = vmul.f32 %v471, %v299
        %v473 = vand.u32 2147483647, %v299
        %vm474 = vcmp.lt.f32.partialorder %v473, 0.0004427343
        %v475 = vsel %vm474, %v472, %v469
        %v476 = vadd.f32 %v301, 1.0
        %v477 = vlog2.pop %v476
        %v478 = vmul.f32 %v477, 0.6931472
        %v479 = vmul.f32 -0.5, %v301
        %v480 = vadd.f32 %v479, 1.0
        %v481 = vmul.f32 %v480, %v301
        %v482 = vand.u32 2147483647, %v301
        %vm483 = vcmp.lt.f32.partialorder %v482, 0.0004427343
        %v484 = vsel %vm483, %v481, %v478
        %v485 = vadd.f32 %v303, 1.0
        %v486 = vlog2.pop %v485
        %v487 = vmul.f32 %v486, 0.6931472
        %v488 = vmul.f32 -0.5, %v303
        %v489 = vadd.f32 %v488, 1.0
        %v490 = vmul.f32 %v489, %v303
        %v491 = vand.u32 2147483647, %v303
        %vm492 = vcmp.lt.f32.partialorder %v491, 0.0004427343
        %v493 = vsel %vm492, %v490, %v487
        %v494 = vadd.f32 %v305, 1.0
        %v495 = vlog2.pop %v494
        %v496 = vmul.f32 %v495, 0.6931472
        %v497 = vmul.f32 -0.5, %v305
        %v498 = vadd.f32 %v497, 1.0
        %v499 = vmul.f32 %v498, %v305
        %v500 = vand.u32 2147483647, %v305
        %vm501 = vcmp.lt.f32.partialorder %v500, 0.0004427343
        %v502 = vsel %vm501, %v499, %v496
        %v503 = vadd.f32 %v307, 1.0
        %v504 = vlog2.pop %v503
        %v505 = vmul.f32 %v504, 0.6931472
        %v506 = vmul.f32 -0.5, %v307
        %v507 = vadd.f32 %v506, 1.0
        %v508 = vmul.f32 %v507, %v307
        %v509 = vand.u32 2147483647, %v307
        %vm510 = vcmp.lt.f32.partialorder %v509, 0.0004427343
        %v511 = vsel %vm510, %v508, %v505
        %v512 = vadd.f32 %v309, 1.0
        %v513 = vlog2.pop %v512
        %v514 = vmul.f32 %v513, 0.6931472
        %v515 = vmul.f32 -0.5, %v309
        %v516 = vadd.f32 %v515, 1.0
        %v517 = vmul.f32 %v516, %v309
        %v518 = vand.u32 2147483647, %v309
        %vm519 = vcmp.lt.f32.partialorder %v518, 0.0004427343
        %v520 = vsel %vm519, %v517, %v514
        %v521 = vadd.f32 %v311, 1.0
        %v522 = vlog2.pop %v521
        %v523 = vmul.f32 %v522, 0.6931472
        %v524 = vmul.f32 -0.5, %v311
        %v525 = vadd.f32 %v524, 1.0
        %v526 = vmul.f32 %v525, %v311
        %v527 = vand.u32 2147483647, %v311
        %vm528 = vcmp.lt.f32.partialorder %v527, 0.0004427343
        %v529 = vsel %vm528, %v526, %v523
        %v530 = vadd.f32 %v313, 1.0
        %v531 = vlog2.pop %v530
        %v532 = vmul.f32 %v531, 0.6931472
        %v533 = vmul.f32 -0.5, %v313
        %v534 = vadd.f32 %v533, 1.0
        %v535 = vmul.f32 %v534, %v313
        %v536 = vand.u32 2147483647, %v313
        %vm537 = vcmp.lt.f32.partialorder %v536, 0.0004427343
        %v538 = vsel %vm537, %v535, %v532
        %v539 = vadd.f32 %v315, 1.0
        %v540 = vlog2.pop %v539
        %v541 = vmul.f32 %v540, 0.6931472
        %v542 = vmul.f32 -0.5, %v315
        %v543 = vadd.f32 %v542, 1.0
        %v544 = vmul.f32 %v543, %v315
        %v545 = vand.u32 2147483647, %v315
        %vm546 = vcmp.lt.f32.partialorder %v545, 0.0004427343
        %v547 = vsel %vm546, %v544, %v541
        %v548 = vadd.f32 %v317, 1.0
        %v549 = vlog2.pop %v548
        %v550 = vmul.f32 %v549, 0.6931472
        %v551 = vmul.f32 -0.5, %v317
        %v552 = vadd.f32 %v551, 1.0
        %v553 = vmul.f32 %v552, %v317
        %v554 = vand.u32 2147483647, %v317
        %vm555 = vcmp.lt.f32.partialorder %v554, 0.0004427343
        %v556 = vsel %vm555, %v553, %v550
        %v557 = vadd.f32 %v319, 1.0
        %v558 = vlog2.pop %v557
        %v559 = vmul.f32 %v558, 0.6931472
        %v560 = vmul.f32 -0.5, %v319
        %v561 = vadd.f32 %v560, 1.0
        %v562 = vmul.f32 %v561, %v319
        %v563 = vand.u32 2147483647, %v319
        %vm564 = vcmp.lt.f32.partialorder %v563, 0.0004427343
        %v565 = vsel %vm564, %v562, %v559
        %v566 = vadd.f32 %v321, 1.0
        %v567 = vlog2.pop %v566
        %v568 = vmul.f32 %v567, 0.6931472
        %v569 = vmul.f32 -0.5, %v321
        %v570 = vadd.f32 %v569, 1.0
        %v571 = vmul.f32 %v570, %v321
        %v572 = vand.u32 2147483647, %v321
        %vm573 = vcmp.lt.f32.partialorder %v572, 0.0004427343
        %v574 = vsel %vm573, %v571, %v568
        %v575 = vadd.f32 %v323, 1.0
        %v576 = vlog2.pop %v575
        %v577 = vmul.f32 %v576, 0.6931472
        %v578 = vmul.f32 -0.5, %v323
        %v579 = vadd.f32 %v578, 1.0
        %v580 = vmul.f32 %v579, %v323
        %v581 = vand.u32 2147483647, %v323
        %vm582 = vcmp.lt.f32.partialorder %v581, 0.0004427343
        %v583 = vsel %vm582, %v580, %v577
        %v584 = vadd.f32 %v325, 1.0
        %v585 = vlog2.pop %v584
        %v586 = vmul.f32 %v585, 0.6931472
        %v587 = vmul.f32 -0.5, %v325
        %v588 = vadd.f32 %v587, 1.0
        %v589 = vmul.f32 %v588, %v325
        %v590 = vand.u32 2147483647, %v325
        %vm591 = vcmp.lt.f32.partialorder %v590, 0.0004427343
        %v592 = vsel %vm591, %v589, %v586
        %v593 = vadd.f32 %v327, 1.0
        %v594 = vlog2.pop %v593
        %v595 = vmul.f32 %v594, 0.6931472
        %v596 = vmul.f32 -0.5, %v327
        %v597 = vadd.f32 %v596, 1.0
        %v598 = vmul.f32 %v597, %v327
        %v599 = vand.u32 2147483647, %v327
        %vm600 = vcmp.lt.f32.partialorder %v599, 0.0004427343
        %v601 = vsel %vm600, %v598, %v595
        %v602 = vadd.f32 %v329, 1.0
        %v603 = vlog2.pop %v602
        %v604 = vmul.f32 %v603, 0.6931472
        %v605 = vmul.f32 -0.5, %v329
        %v606 = vadd.f32 %v605, 1.0
        %v607 = vmul.f32 %v606, %v329
        %v608 = vand.u32 2147483647, %v329
        %vm609 = vcmp.lt.f32.partialorder %v608, 0.0004427343
        %v610 = vsel %vm609, %v607, %v604
        %v611 = vadd.f32 %v331, 1.0
        %v612 = vlog2.pop %v611
        %v613 = vmul.f32 %v612, 0.6931472
        %v614 = vmul.f32 -0.5, %v331
        %v615 = vadd.f32 %v614, 1.0
        %v616 = vmul.f32 %v615, %v331
        %v617 = vand.u32 2147483647, %v331
        %vm618 = vcmp.lt.f32.partialorder %v617, 0.0004427343
        %v619 = vsel %vm618, %v616, %v613
        %v620 = vadd.f32 %v172, %v340
        %v621 = vadd.f32 %v173, %v349
        %v622 = vadd.f32 %v174, %v358
        %v623 = vadd.f32 %v175, %v367
        %v624 = vadd.f32 %v176, %v376
        %v625 = vadd.f32 %v177, %v385
        %v626 = vadd.f32 %v178, %v394
        %v627 = vadd.f32 %v179, %v403
        %v628 = vadd.f32 %v180, %v412
        %v629 = vadd.f32 %v181, %v421
        %v630 = vadd.f32 %v182, %v430
        %v631 = vadd.f32 %v183, %v439
        %v632 = vadd.f32 %v184, %v448
        %v633 = vadd.f32 %v185, %v457
        %v634 = vadd.f32 %v186, %v466
        %v635 = vadd.f32 %v187, %v475
        %v636 = vadd.f32 %v188, %v484
        %v637 = vadd.f32 %v189, %v493
        %v638 = vadd.f32 %v190, %v502
        %v639 = vadd.f32 %v191, %v511
        %v640 = vadd.f32 %v192, %v520
        %v641 = vadd.f32 %v193, %v529
        %v642 = vadd.f32 %v194, %v538
        %v643 = vadd.f32 %v195, %v547
        %v644 = vadd.f32 %v196, %v556
        %v645 = vadd.f32 %v197, %v565
        %v646 = vadd.f32 %v198, %v574
        %v647 = vadd.f32 %v199, %v583
        %v648 = vadd.f32 %v200, %v592
        %v649 = vadd.f32 %v201, %v601
        %v650 = vadd.f32 %v202, %v610
        %v651 = vadd.f32 %v203, %v619
        %v652 = vadd.f32 %v620, 0.0001
        %v653 = vadd.f32 %v621, 0.0001
        %v654 = vadd.f32 %v622, 0.0001
        %v655 = vadd.f32 %v623, 0.0001
        %v656 = vadd.f32 %v624, 0.0001
        %v657 = vadd.f32 %v625, 0.0001
        %v658 = vadd.f32 %v626, 0.0001
        %v659 = vadd.f32 %v627, 0.0001
        %v660 = vadd.f32 %v628, 0.0001
        %v661 = vadd.f32 %v629, 0.0001
        %v662 = vadd.f32 %v630, 0.0001
        %v663 = vadd.f32 %v631, 0.0001
        %v664 = vadd.f32 %v632, 0.0001
        %v665 = vadd.f32 %v633, 0.0001
        %v666 = vadd.f32 %v634, 0.0001
        %v667 = vadd.f32 %v635, 0.0001
        %v668 = vadd.f32 %v636, 0.0001
        %v669 = vadd.f32 %v637, 0.0001
        %v670 = vadd.f32 %v638, 0.0001
        %v671 = vadd.f32 %v639, 0.0001
        %v672 = vadd.f32 %v640, 0.0001
        %v673 = vadd.f32 %v641, 0.0001
        %v674 = vadd.f32 %v642, 0.0001
        %v675 = vadd.f32 %v643, 0.0001
        %v676 = vadd.f32 %v644, 0.0001
        %v677 = vadd.f32 %v645, 0.0001
        %v678 = vadd.f32 %v646, 0.0001
        %v679 = vadd.f32 %v647, 0.0001
        %v680 = vadd.f32 %v648, 0.0001
        %v681 = vadd.f32 %v649, 0.0001
        %v682 = vadd.f32 %v650, 0.0001
        %v683 = vadd.f32 %v651, 0.0001
        %684 = vst [vmem:[%s137] sm:$0xff] %v652
        %685 = vst [vmem:[%s137 + $0x8] sm:$0xff] %v653
        %686 = vst [vmem:[%s137 + $0x10] sm:$0xff] %v654
        %687 = vst [vmem:[%s137 + $0x18] sm:$0xff] %v655
        %688 = vst [vmem:[%s137 + $0x20] sm:$0xff] %v656
        %689 = vst [vmem:[%s137 + $0x28] sm:$0xff] %v657
        %690 = vst [vmem:[%s137 + $0x30] sm:$0xff] %v658
        %691 = vst [vmem:[%s137 + $0x38] sm:$0xff] %v659
        %692 = vst [vmem:[%s137 + $0x40] sm:$0xff] %v660
        %693 = vst [vmem:[%s137 + $0x48] sm:$0xff] %v661
        %694 = vst [vmem:[%s137 + $0x50] sm:$0xff] %v662
        %695 = vst [vmem:[%s137 + $0x58] sm:$0xff] %v663
        %696 = vst [vmem:[%s137 + $0x60] sm:$0xff] %v664
        %697 = vst [vmem:[%s137 + $0x68] sm:$0xff] %v665
        %698 = vst [vmem:[%s137 + $0x70] sm:$0xff] %v666
        %699 = vst [vmem:[%s137 + $0x78] sm:$0xff] %v667
        %700 = vst [vmem:[%s137 + $0x80] sm:$0xff] %v668
        %701 = vst [vmem:[%s137 + $0x88] sm:$0xff] %v669
        %702 = vst [vmem:[%s137 + $0x90] sm:$0xff] %v670
        %703 = vst [vmem:[%s137 + $0x98] sm:$0xff] %v671
        %704 = vst [vmem:[%s137 + $0xa0] sm:$0xff] %v672
        %705 = vst [vmem:[%s137 + $0xa8] sm:$0xff] %v673
        %706 = vst [vmem:[%s137 + $0xb0] sm:$0xff] %v674
        %707 = vst [vmem:[%s137 + $0xb8] sm:$0xff] %v675
        %708 = vst [vmem:[%s137 + $0xc0] sm:$0xff] %v676
        %709 = vst [vmem:[%s137 + $0xc8] sm:$0xff] %v677
        %710 = vst [vmem:[%s137 + $0xd0] sm:$0xff] %v678
        %711 = vst [vmem:[%s137 + $0xd8] sm:$0xff] %v679
        %712 = vst [vmem:[%s137 + $0xe0] sm:$0xff] %v680
        %713 = vst [vmem:[%s137 + $0xe8] sm:$0xff] %v681
        %714 = vst [vmem:[%s137 + $0xf0] sm:$0xff] %v682
        %715 = vst [vmem:[%s137 + $0xf8] sm:$0xff] %v683
        %s716 = sand.u32 %s52, 1
        %s717 = scalar_lea.sflag [#allocation4], %s716
        %s718 = sand.u32 %s52, 1
        %s719 = smul.addr %s718, 256
        %s720 = scalar_lea.vmem [#allocation5], %s719
        // Predicated region
        $region29: #{tpu_custom_call.1} parent=23 // pred_check
          %p721 = pneg %p62
        $region30: #{tpu_custom_call.1} parent=23 // pred_check_branch
          %723 = sbr.rel (%p721) target = $region32
        $region31: #{tpu_custom_call.1} parent=23 // pred_region
          %s724 = smul.u32 4, %s18
          %726 = vsyncadd %s717, 0
          %s727 = smul.addr %s724, 8
          %s728 = smul.addr %s727, 8
          %s729 = scalar_lea.hbm %s1, %s728
          %s730 = sshll.u32 %s720, 4
          %s731 = int_to_ptr.vmem [resolvable:$true] %s730
          %s732 = sshll.u32 %s729, 4
          %s733 = int_to_ptr.hbm [resolvable:$true] %s732
          %738 = dma.vmem_to_hbm [thread:$0]  %s731, 4096, %s733, %s717, 1024, 1024, 64
        $region32: #{tpu_custom_call.1} parent=23 // pred_fallthru
          _
      $region24: #{tpu_custom_call.1} parent=5 // pred_fallthru
        _
      %p739 = scmp.le.s32.totalorder 2, %s13
      // Predicated region
      $region33: #{tpu_custom_call.1} parent=5 // pred_check
        %p740 = pneg %p739
      $region34: #{tpu_custom_call.1} parent=5 // pred_check_branch
        %742 = sbr.rel (%p740) target = $region36
      $region35: #{tpu_custom_call.1} parent=5 // pred_region
        %s743 = ssub.s32 %s13, 2
        // Predicated region
        $region37: #{tpu_custom_call.1} parent=35 // pred_check
          %p744 = pneg %p68
        $region38: #{tpu_custom_call.1} parent=35 // pred_check_branch
          %746 = sbr.rel (%p744) target = $region40
        $region39: #{tpu_custom_call.1} parent=35 // pred_region
          %s747 = sand.u32 %s53, 1
          %s748 = scalar_lea.sflag [#allocation4], %s747
          %s749 = sand.u32 %s53, 1
          %s750 = smul.addr %s749, 256
          %s751 = scalar_lea.vmem [#allocation5], %s750
          %753 = dma.done %s748, 4096
        $region40: #{tpu_custom_call.1} parent=35 // pred_fallthru
          _
      $region36: #{tpu_custom_call.1} parent=5 // pred_fallthru
        _
    $region6: #{tpu_custom_call.1} parent=1 // loop_footer
      %s17 = sadd.s32 1, %s13
    $region7: #{tpu_custom_call.1} parent=1 // loop_footer_branch
      %12 = sbr.rel target = $region3
    $region8: #{tpu_custom_call.1} parent=1 // loop_exit
      _
    %754 = vsyncpa [#allocation3], 1
    %s755 = scalar_lea.sflag [#allocation3], 1
    %756 = vsyncpa %s755, 1
    %757 = vsyncpa [#allocation4], 1
    %s758 = scalar_lea.sflag [#allocation4], 1
    %759 = vsyncpa %s758, 1

</llo_original>
